<compile_context>
chip_gen: v7x
topology: tpu7x:2x2x1
jax: 0.10.0
libtpu: 0.0.40
codegen_flags: <defaults>
</compile_context>

<pallas_src>
import numpy as np

import jax
import jax.numpy as jnp
from jax.experimental import pallas as pl
from jax.experimental.pallas import tpu as pltpu

_LANE = 128
_COL_CANDIDATES = (32768, 16384, 8192, 4096, 2048, 1024, 512, 256, 128)
# ~2 MiB per block -> double-buffered in + out is ~8 MiB VMEM, comfortably under
# the default scoped-VMEM limit on every generation (16 MiB v5e, 32 MiB v6e/v7x).
_BLOCK_BUDGET_BYTES = 2 * 1024 * 1024
_FULL_BLOCK_CAP_BYTES = 8 * 1024 * 1024


def _identity_kernel(x_ref, o_ref):
    # Pure copy of the current VMEM tile.
    o_ref[...] = x_ref[...]


def _min_sublanes(dtype) -> int:
    # f32 -> 8, bf16/f16 -> 16, int8/fp8 -> 32 (sub-32-bit dtypes pack along sublanes).
    itemsize = jnp.dtype(dtype).itemsize
    return max(8, 32 // max(itemsize, 1))


def _pick_tile_rows(rows: int, cols: int, itemsize: int, min_sub: int):
    """Largest sublane-aligned row count that divides `rows` and fits the block budget."""
    budget_rows = max(min_sub, _BLOCK_BUDGET_BYTES // (cols * itemsize))
    r = min(rows, budget_rows)
    r = (r // min_sub) * min_sub
    while r >= min_sub:
        if rows % r == 0:
            return r
        r -= min_sub
    # No aligned divisor: a full-extent block is still legal if it fits VMEM.
    if rows * cols * itemsize <= _FULL_BLOCK_CAP_BYTES:
        return rows
    return None


def _plan_padfree(total: int, itemsize: int, min_sub: int):
    """Factorize total -> (rows, cols, tile_rows) with no padding, or None."""
    if total % _LANE != 0:
        return None
    cols = None
    # Prefer a factorization whose row count is sublane-aligned (fully unmasked tiles).
    for c in _COL_CANDIDATES:
        if total % c == 0 and (total // c) % min_sub == 0:
            cols = c
            break
    if cols is None:
        for c in _COL_CANDIDATES:
            if total % c == 0:
                cols = c
                break
    if cols is None:
        return None
    rows = total // cols
    tile_rows = _pick_tile_rows(rows, cols, itemsize, min_sub)
    if tile_rows is None:
        return None
    return rows, cols, tile_rows


def backbone_forward(x: jax.Array) -> jax.Array:
    """Identity backbone: returns x unchanged (expressed as a Pallas copy kernel)."""
    orig_shape = x.shape
    dtype = x.dtype
    total = x.size
    if total == 0:
        return x

    itemsize = jnp.dtype(dtype).itemsize
    min_sub = _min_sublanes(dtype)

    plan = _plan_padfree(total, itemsize, min_sub)
    if plan is not None:
        rows, cols, tile_rows = plan
        pad = 0
        x2d = x.reshape(rows, cols)
    else:
        # Ragged fallback: pad the flat view up to a sublane-aligned, lane-dense
        # (rows, 512) slab.  Pad waste is at most min_sub*512 elements.
        cols = 512
        chunk = min_sub * cols
        padded_total = ((total + chunk - 1) // chunk) * chunk
        pad = padded_total - total
        x_flat = x.reshape(-1)
        if pad:
            x_flat = jnp.pad(x_flat, (0, pad))
        rows = padded_total // cols
        x2d = x_flat.reshape(rows, cols)
        tile_rows = _pick_tile_rows(rows, cols, itemsize, min_sub)
        assert tile_rows is not None  # rows is a multiple of min_sub by construction

    grid = (rows // tile_rows,)
    block_bytes = tile_rows * cols * itemsize

    out2d = pl.pallas_call(
        _identity_kernel,
        out_shape=jax.ShapeDtypeStruct((rows, cols), dtype),
        grid_spec=pltpu.PrefetchScalarGridSpec(
            num_scalar_prefetch=0,
            grid=grid,
            in_specs=[pl.BlockSpec((tile_rows, cols), lambda i: (i, 0))],
            out_specs=pl.BlockSpec((tile_rows, cols), lambda i: (i, 0)),
        ),
        compiler_params=pltpu.CompilerParams(
            dimension_semantics=("parallel",),
            vmem_limit_bytes=min(64 * 1024 * 1024,
                                 max(32 * 1024 * 1024, 6 * block_bytes)),
        ),
        cost_estimate=pl.CostEstimate(
            flops=0,
            transcendentals=0,
            bytes_accessed=2 * total * itemsize,
        ),
        # Alias output onto the input buffer so XLA can elide the HBM round trip
        # whenever the input is dead after this call.
        input_output_aliases={0: 0},
    )(x2d)

    if pad:
        return out2d.reshape(-1)[:total].reshape(orig_shape)
    return out2d.reshape(orig_shape)


if __name__ == "__main__":
    key = jax.random.PRNGKey(0)
    # Small NCHW input consistent with a backbone feature-extractor input.
    x = jax.random.normal(key, (2, 4, 16, 16), dtype=jnp.float32)

    # Snapshot the reference on the host BEFORE the (possibly aliasing) call.
    x_ref = np.asarray(x)

    y = backbone_forward(x)
    y = jax.block_until_ready(y)

    assert y.shape == x_ref.shape, (y.shape, x_ref.shape)
    assert y.dtype == x_ref.dtype, (y.dtype, x_ref.dtype)
    assert np.array_equal(np.asarray(y), x_ref), "identity kernel output mismatch"

    print("KERNEL_OK")
</pallas_src>

<mosaic_0001>
module attributes {stable_mosaic.version = 11 : i64} {
  func.func @_identity_kernel(%arg0: i32, %arg1: memref<8x256xf32, #tpu.memory_space<vmem>>, %arg2: memref<8x256xf32, #tpu.memory_space<vmem>>) attributes {dimension_semantics = [#tpu.dimension_semantics<parallel>], iteration_bounds = array<i64: 1>, scalar_prefetch = 0 : i64, scratch_operands = 0 : i64, tpu.core_type = #tpu.core_type<tc>, window_params = [{transform_indices = @transform_0, window_bounds = array<i64: 8, 256>}, {transform_indices = @transform_1, window_bounds = array<i64: 8, 256>}]} {
    %c0 = arith.constant 0 : index
    %c0_0 = arith.constant 0 : index
    %0 = vector.load %arg1[%c0, %c0_0] : memref<8x256xf32, #tpu.memory_space<vmem>>, vector<8x256xf32>
    %c0_1 = arith.constant 0 : index
    %c0_2 = arith.constant 0 : index
    %1 = vector.load %arg2[%c0_1, %c0_2] : memref<8x256xf32, #tpu.memory_space<vmem>>, vector<8x256xf32>
    tpu.vector_store %arg2[%c0_1, %c0_2], %0 {strides = array<i32>} : memref<8x256xf32, #tpu.memory_space<vmem>>, vector<8x256xf32>,
    return
  }
  func.func @transform_0(%arg0: i32) -> (i32, i32) {
    %c0_i32 = arith.constant 0 : i32
    %c0_i32_0 = arith.constant 0 : i32
    return %arg0, %c0_i32 : i32, i32
  }
  func.func @transform_1(%arg0: i32) -> (i32, i32) {
    %c0_i32 = arith.constant 0 : i32
    %c0_i32_0 = arith.constant 0 : i32
    return %arg0, %c0_i32 : i32, i32
  }
}

</mosaic_0001>

<llo_original>
// kernel: tpu_custom_call.1
$region0: #{tpu_custom_call.1}
  #allocation0 [shape = 'u32[]', space=smem, size = 0x4, offset = 0x4, fixed_abs, tag = 'smem constant byte address 0x4 - core index']
  #allocation1 [shape = 'u32[144,128]{1,0:T(1,128)}', space=vmem, size = 0x12000, scoped, tag = 'internal scratch']
  %s0 = inlined_call_operand.hbm [shape: f32[8,256], index: 0, kind: input, shape index: {}, may-alias: {0,1}]
  %s1 = inlined_call_operand.hbm [shape: f32[8,256], index: 1, kind: output, shape index: {}, may-alias: {0,1}]
  %s2 = sld [smem:[#allocation0]]
  $region18: #{tpu_custom_call.1} parent=0
    _
  %s4 = ssub.s32 1, %s2
  %s5 = scalar_select 0, %s4, %s2
  $region1: #{tpu_custom_call.1} parent=0
    #allocation2 [shape = 'u8[8192]{0}', space=vmem, size = 0x2000, scoped, tag = 'input window, operand 0, single buffered']
    #allocation3 [shape = 's32[1]{0}', space=sflag, size = 0x4, scoped, tag = 'scoped memory for tpu_custom_call.1']
    #allocation4 [shape = 's32[1]{0}', space=sflag, size = 0x4, scoped, tag = 'scoped memory for tpu_custom_call.1']
    #allocation5 [shape = 'u8[8192]{0}', space=vmem, size = 0x2000, scoped, tag = 'output window, operand 0, single buffered']
    %6 = vsyncpa [#allocation3], 0
    %7 = vsyncpa [#allocation4], 0
    // Predicated region
    $region2: #{tpu_custom_call.1} parent=1 // pred_check
      _
    $region3: #{tpu_custom_call.1} parent=1 // pred_check_branch
      %9 = sbr.rel (0) target = $region5
    $region4: #{tpu_custom_call.1} parent=1 // pred_region
      %s11 = ssub.s32 256, 256
      %12 = vsyncadd [#allocation3], %s11
      %s14 = sshll.u32 [#allocation2], 4
      %s15 = int_to_ptr.vmem [resolvable:$true] %s14
      %17 = dma.hbm_to_vmem [thread:$0]  %s0, 256, %s15, [#allocation3]
    $region5: #{tpu_custom_call.1} parent=1 // pred_fallthru
      _
    // Predicated region
    $region6: #{tpu_custom_call.1} parent=1 // pred_check
      _
    $region7: #{tpu_custom_call.1} parent=1 // pred_check_branch
      %19 = sbr.rel (0) target = $region9
    $region8: #{tpu_custom_call.1} parent=1 // pred_region
      %20 = dma.done [#allocation3], 256
    $region9: #{tpu_custom_call.1} parent=1 // pred_fallthru
      _
    %v21 = vld [vmem:[#allocation2] sm:$0xff]
    %v22 = vld [vmem:[#allocation2 + $0x8] sm:$0xff]
    %23 = vst [vmem:[#allocation5] sm:$0xff] %v21
    %24 = vst [vmem:[#allocation5 + $0x8] sm:$0xff] %v22
    // Predicated region
    $region10: #{tpu_custom_call.1} parent=1 // pred_check
      _
    $region11: #{tpu_custom_call.1} parent=1 // pred_check_branch
      %26 = sbr.rel (0) target = $region13
    $region12: #{tpu_custom_call.1} parent=1 // pred_region
      %s28 = ssub.s32 256, 256
      %29 = vsyncadd [#allocation4], %s28
      %s31 = sshll.u32 [#allocation5], 4
      %s32 = int_to_ptr.vmem [resolvable:$true] %s31
      %34 = dma.vmem_to_hbm [thread:$0]  %s32, 256, %s1, [#allocation4]
    $region13: #{tpu_custom_call.1} parent=1 // pred_fallthru
      _
    // Predicated region
    $region14: #{tpu_custom_call.1} parent=1 // pred_check
      _
    $region15: #{tpu_custom_call.1} parent=1 // pred_check_branch
      %36 = sbr.rel (0) target = $region17
    $region16: #{tpu_custom_call.1} parent=1 // pred_region
      %37 = dma.done [#allocation4], 256
    $region17: #{tpu_custom_call.1} parent=1 // pred_fallthru
      _
    %38 = vsyncpa [#allocation3], 1
    %39 = vsyncpa [#allocation4], 1

</llo_original>
